<compile_context>
chip_gen: v7x
topology: tpu7x:2x2x1
jax: 0.10.0
libtpu: 0.0.40
codegen_flags: <defaults>
</compile_context>

<pallas_src>
import jax
import jax.numpy as jnp
from jax.experimental import pallas as pl
from jax.experimental.pallas import tpu as pltpu


def _round_up(x, m):
    return ((x + m - 1) // m) * m


def linear_kernel(x_ref, w_ref, b_ref, o_ref):
    # x_ref: (TB, 784) f32   -- cast to bf16 in-register, right before the MXU
    # w_ref: (784, 128) bf16 -- resident (constant index_map), zero-padded cols
    # b_ref: (1, 128)   f32  -- resident, zero-padded
    # o_ref: (TB, 128)  bf16 -- lane-dense padded output
    x_bf = x_ref[...].astype(jnp.bfloat16)
    acc = jnp.dot(x_bf, w_ref[...], preferred_element_type=jnp.float32)
    o_ref[...] = (acc + b_ref[...]).astype(o_ref.dtype)


def mnist_logistic_forward(x, w_t, b, *, tb=1024):
    """Forward of nn.Linear(784, 10): y = x @ W.T + b.

    x:   (B, 784) float32
    w_t: (784, 10) float32   (PyTorch weight (10, 784) stored pre-transposed)
    b:   (10,)    float32
    returns (B, 10) float32
    """
    B, d_in = x.shape
    d_out = w_t.shape[1]

    # Lane-dense output width: exactly one lane width (128). Do not widen.
    n_pad = _round_up(d_out, 128)

    # Pad weight / bias columns once (zero columns => zero padded outputs).
    # For static-weight inference these should be precomputed outside the
    # per-call path; under jit they are constant-folded / hoisted anyway.
    w_p = jnp.zeros((d_in, n_pad), jnp.bfloat16).at[:, :d_out].set(
        w_t.astype(jnp.bfloat16))
    b_p = jnp.zeros((1, n_pad), jnp.float32).at[:, :d_out].set(
        b.astype(jnp.float32))

    # Batch tile: multiple of 8 sublanes; cap so the grid has >= 2 steps
    # whenever the batch allows (lets "parallel" shard across v7x's 2 TCs).
    tb_eff = _round_up(min(tb, B), 8)
    if B > 8:
        tb_eff = min(tb_eff, _round_up(pl.cdiv(B, 2), 8))
    grid = (pl.cdiv(B, tb_eff),)   # no batch padding; last tile is masked

    out = pl.pallas_call(
        linear_kernel,
        out_shape=jax.ShapeDtypeStruct((B, n_pad), jnp.bfloat16),
        grid=grid,
        in_specs=[
            pl.BlockSpec((tb_eff, d_in), lambda i: (i, 0)),   # streamed f32 x tiles
            pl.BlockSpec((d_in, n_pad), lambda i: (0, 0)),    # resident bf16 weights
            pl.BlockSpec((1, n_pad), lambda i: (0, 0)),       # resident f32 bias
        ],
        out_specs=pl.BlockSpec((tb_eff, n_pad), lambda i: (i, 0)),
        compiler_params=pltpu.CompilerParams(
            dimension_semantics=("parallel",),
        ),
    )(x, w_p, b_p)

    # Slice off padded lanes and restore f32; fuses into one small XLA op.
    # NOTE: padded lanes 10..127 hold exactly 0.0 -- they must be sliced off
    # (or masked to -inf) before any softmax/argmax consumer.
    return out[:, :d_out].astype(jnp.float32)


if __name__ == "__main__":
    key = jax.random.PRNGKey(0)
    k_x, k_w, k_b = jax.random.split(key, 3)

    B, D_in, D_out = 64, 784, 10  # bs = 64 in the PyTorch walkthrough

    # nn.Linear(784, 10) init; keep the transposed (784, 10) form.
    bound = 1.0 / (D_in ** 0.5)
    w_t = jax.random.uniform(k_w, (D_in, D_out), jnp.float32, -bound, bound)
    b = jax.random.uniform(k_b, (D_out,), jnp.float32, -bound, bound)

    # Example input batch (like xb = x_train[0:bs]).
    x = jax.random.uniform(k_x, (B, D_in), jnp.float32)

    out = mnist_logistic_forward(x, w_t, b)
    jax.block_until_ready(out)
    assert out.shape == (B, D_out)

    # Reference matching the kernel's matmul numerics (bf16 inputs, f32 acc).
    ref_bf16 = jnp.dot(x.astype(jnp.bfloat16), w_t.astype(jnp.bfloat16),
                       preferred_element_type=jnp.float32) + b
    assert jnp.allclose(out, ref_bf16, atol=2e-2, rtol=2e-2)

    # Looser sanity check against the pure-f32 nn.Linear semantics.
    ref_f32 = x @ w_t + b
    assert jnp.allclose(out, ref_f32, atol=5e-2, rtol=5e-2)

    # Non-divisible batch (exercises the masked partial last tile / cdiv grid).
    B2 = 50
    x2 = jax.random.uniform(jax.random.PRNGKey(1), (B2, D_in), jnp.float32)
    out2 = mnist_logistic_forward(x2, w_t, b)
    jax.block_until_ready(out2)
    assert out2.shape == (B2, D_out)
    ref2 = jnp.dot(x2.astype(jnp.bfloat16), w_t.astype(jnp.bfloat16),
                   preferred_element_type=jnp.float32) + b
    assert jnp.allclose(out2, ref2, atol=2e-2, rtol=2e-2)

    print("KERNEL_OK")
</pallas_src>

<mosaic_0001>
module attributes {stable_mosaic.version = 11 : i64} {
  func.func @linear_kernel(%arg0: i32, %arg1: memref<32x784xf32, #tpu.memory_space<vmem>>, %arg2: memref<784x128xbf16, #tpu.memory_space<vmem>>, %arg3: memref<1x128xf32, #tpu.memory_space<vmem>>, %arg4: memref<32x128xbf16, #tpu.memory_space<vmem>>) attributes {dimension_semantics = [#tpu.dimension_semantics<parallel>], iteration_bounds = array<i64: 2>, scalar_prefetch = 0 : i64, scratch_operands = 0 : i64, tpu.core_type = #tpu.core_type<tc>, window_params = [{transform_indices = @transform_0, window_bounds = array<i64: 32, 784>}, {pipeline_mode = #tpu.pipeline_mode<synchronous>, transform_indices = @transform_1, window_bounds = array<i64: 784, 128>}, {pipeline_mode = #tpu.pipeline_mode<synchronous>, transform_indices = @transform_2, window_bounds = array<i64: 1, 128>}, {transform_indices = @transform_3, window_bounds = array<i64: 32, 128>}]} {
    %c0 = arith.constant 0 : index
    %c0_0 = arith.constant 0 : index
    %0 = vector.load %arg1[%c0, %c0_0] : memref<32x784xf32, #tpu.memory_space<vmem>>, vector<32x784xf32>
    %1 = arith.truncf %0 : vector<32x784xf32> to vector<32x784xbf16>
    %c0_1 = arith.constant 0 : index
    %c0_2 = arith.constant 0 : index
    %2 = vector.load %arg2[%c0_1, %c0_2] : memref<784x128xbf16, #tpu.memory_space<vmem>>, vector<784x128xbf16>
    %cst = arith.constant dense<0.000000e+00> : vector<32x128xf32>
    %3 = tpu.matmul %1, %2, %cst {dimension_numbers = #tpu.dot_dimension_numbers<[1], [0], [0], [1], [0, 0, 1, 1], [], []>} : vector<32x784xbf16>, vector<784x128xbf16>, vector<32x128xf32> -> vector<32x128xf32>
    %c0_3 = arith.constant 0 : index
    %c0_4 = arith.constant 0 : index
    %4 = vector.load %arg3[%c0_3, %c0_4] : memref<1x128xf32, #tpu.memory_space<vmem>>, vector<1x128xf32>
    %5 = vector.broadcast %4 : vector<1x128xf32> to vector<32x128xf32>
    %6 = arith.addf %3, %5 : vector<32x128xf32>
    %7 = arith.truncf %6 : vector<32x128xf32> to vector<32x128xbf16>
    %c0_5 = arith.constant 0 : index
    %c0_6 = arith.constant 0 : index
    %8 = vector.load %arg4[%c0_5, %c0_6] : memref<32x128xbf16, #tpu.memory_space<vmem>>, vector<32x128xbf16>
    tpu.vector_store %arg4[%c0_5, %c0_6], %7 {strides = array<i32>} : memref<32x128xbf16, #tpu.memory_space<vmem>>, vector<32x128xbf16>,
    return
  }
  func.func @transform_0(%arg0: i32) -> (i32, i32) {
    %c0_i32 = arith.constant 0 : i32
    %c0_i32_0 = arith.constant 0 : i32
    return %arg0, %c0_i32 : i32, i32
  }
  func.func @transform_1(%arg0: i32) -> (i32, i32) {
    %c0_i32 = arith.constant 0 : i32
    %c0_i32_0 = arith.constant 0 : i32
    %c0_i32_1 = arith.constant 0 : i32
    return %c0_i32, %c0_i32_0 : i32, i32
  }
  func.func @transform_2(%arg0: i32) -> (i32, i32) {
    %c0_i32 = arith.constant 0 : i32
    %c0_i32_0 = arith.constant 0 : i32
    %c0_i32_1 = arith.constant 0 : i32
    return %c0_i32, %c0_i32_0 : i32, i32
  }
  func.func @transform_3(%arg0: i32) -> (i32, i32) {
    %c0_i32 = arith.constant 0 : i32
    %c0_i32_0 = arith.constant 0 : i32
    return %arg0, %c0_i32 : i32, i32
  }
}

</mosaic_0001>

<llo_original>
// kernel: tpu_custom_call.1
$region0: #{tpu_custom_call.1}
  #allocation0 [shape = 'u32[]', space=smem, size = 0x4, offset = 0x4, fixed_abs, tag = 'smem constant byte address 0x4 - core index']
  #allocation1 [shape = 'u32[144,128]{1,0:T(1,128)}', space=vmem, size = 0x12000, scoped, tag = 'internal scratch']
  %s0 = inlined_call_operand.hbm [shape: f32[64,784], index: 0, kind: input, shape index: {}]
  %s1 = inlined_call_operand.hbm [shape: bf16[784,128], index: 1, kind: input, shape index: {}]
  %s2 = inlined_call_operand.vmem [shape: f32[1,128], index: 2, kind: input, shape index: {}]
  %s3 = inlined_call_operand.hbm [shape: bf16[64,128], index: 3, kind: output, shape index: {}]
  %s4 = sld [smem:[#allocation0]]
  $region53: #{tpu_custom_call.1} parent=0
    _
  %s6 = ssub.s32 1, %s4
  %s7 = scalar_select 0, %s6, %s4
  $region1: #{tpu_custom_call.1} parent=0
    #allocation2 [shape = 'u8[229376]{0}', space=vmem, size = 0x38000, scoped, tag = 'input window, operand 0']
    #allocation3 [shape = 's32[2]{0}', space=sflag, size = 0x8, scoped, tag = 'scoped memory for tpu_custom_call.1']
    #allocation4 [shape = 's32[2]{0}', space=sflag, size = 0x8, scoped, tag = 'scoped memory for tpu_custom_call.1']
    #allocation5 [shape = 'u8[200704]{0}', space=vmem, size = 0x31000, scoped, tag = 'input window, operand 1, single buffered']
    #allocation6 [shape = 's32[1]{0}', space=sflag, size = 0x4, scoped, tag = 'scoped memory for tpu_custom_call.1']
    #allocation7 [shape = 'u8[16384]{0}', space=vmem, size = 0x4000, scoped, tag = 'output window, operand 0']
    %8 = vsyncpa [#allocation3], 0
    %s9 = scalar_lea.sflag [#allocation3], 1
    %10 = vsyncpa %s9, 0
    %11 = vsyncpa [#allocation6], 0
    %12 = vsyncpa [#allocation4], 0
    %s13 = scalar_lea.sflag [#allocation4], 1
    %14 = vsyncpa %s13, 0
    loop: start=0, step=1, limit=4
    $region2: #{tpu_custom_call.1} parent=1 // loop_pre_header
      _
    $region3: #{tpu_custom_call.1} parent=1 // loop_header
      %s16 = sphi 0, %s20
      %p17 = scmp.ge.s32.totalorder %s16, 4
      %s26 = sphi 0, %s28
      %s29 = sphi 0, %s26
      %s30 = sphi 0, %s29
      %s46 = sphi 0, %s30
      %s50 = sphi 0, %s50
      %s52 = sphi 0, %s50
      %s53 = sphi 0, %s52
      %s67 = sphi 0, %s53
      %s71 = sphi 0, %s71
      %s73 = sphi 0, %s71
      %s74 = sphi 0, %s73
      %s88 = sphi 0, %s74
      %s94 = sphi 0, %s96
      %s97 = sphi 0, %s94
      %s98 = sphi 0, %s97
      %s114 = sphi 0, %s98
    $region4: #{tpu_custom_call.1} parent=1 // loop_header_branch
      %19 = sbr.rel (%p17) target = $region8
    $region5: #{tpu_custom_call.1} parent=1 // loop_body
      %s21 = ssub.s32 %s16, 1
      %s22 = ssub.s32 %s16, 2
      %s23 = sadd.s32 %s16, 1
      %s24 = ssub.s32 %s16, %s23
      %p25 = scmp.eq.s32.totalorder %s24, 0
      %s27 = sadd.s32 %s26, 1
      %s28 = scalar_select %p25, %s26, %s27
      %p31 = pneg %p25
      %p32 = scmp.eq.s32.totalorder %s16, 1
      %p33 = por %p31, %p32
      %p34 = scmp.ne.s32.totalorder %s26, %s29
      %p35 = scmp.eq.s32.totalorder %s16, 0
      %p36 = por %p34, %p35
      %p37 = scmp.ne.s32.totalorder %s26, %s29
      %p38 = scmp.eq.s32.totalorder %s21, 1
      %p39 = por %p37, %p38
      %p40 = scmp.ne.s32.totalorder %s29, %s30
      %p41 = scmp.eq.s32.totalorder %s21, 0
      %p42 = por %p40, %p41
      %p43 = scmp.ne.s32.totalorder %s29, %s30
      %p44 = scmp.eq.s32.totalorder %s22, 1
      %p45 = por %p43, %p44
      %p47 = scmp.ne.s32.totalorder %s30, %s46
      %p48 = scmp.eq.s32.totalorder %s22, 0
      %p49 = por %p47, %p48
      %s51 = sadd.s32 %s50, 1
      %p54 = scmp.eq.s32.totalorder %s16, 1
      %p55 = scmp.ne.s32.totalorder %s50, %s52
      %p56 = scmp.eq.s32.totalorder %s16, 0
      %p57 = por %p55, %p56
      %p58 = scmp.ne.s32.totalorder %s50, %s52
      %p59 = scmp.eq.s32.totalorder %s21, 1
      %p60 = por %p58, %p59
      %p61 = scmp.ne.s32.totalorder %s52, %s53
      %p62 = scmp.eq.s32.totalorder %s21, 0
      %p63 = por %p61, %p62
      %p64 = scmp.ne.s32.totalorder %s52, %s53
      %p65 = scmp.eq.s32.totalorder %s22, 1
      %p66 = por %p64, %p65
      %p68 = scmp.ne.s32.totalorder %s53, %s67
      %p69 = scmp.eq.s32.totalorder %s22, 0
      %p70 = por %p68, %p69
      %s72 = sadd.s32 %s71, 1
      %p75 = scmp.eq.s32.totalorder %s16, 1
      %p76 = scmp.ne.s32.totalorder %s71, %s73
      %p77 = scmp.eq.s32.totalorder %s16, 0
      %p78 = por %p76, %p77
      %p79 = scmp.ne.s32.totalorder %s71, %s73
      %p80 = scmp.eq.s32.totalorder %s21, 1
      %p81 = por %p79, %p80
      %p82 = scmp.ne.s32.totalorder %s73, %s74
      %p83 = scmp.eq.s32.totalorder %s21, 0
      %p84 = por %p82, %p83
      %p85 = scmp.ne.s32.totalorder %s73, %s74
      %p86 = scmp.eq.s32.totalorder %s22, 1
      %p87 = por %p85, %p86
      %p89 = scmp.ne.s32.totalorder %s74, %s88
      %p90 = scmp.eq.s32.totalorder %s22, 0
      %p91 = por %p89, %p90
      %s92 = ssub.s32 %s16, %s23
      %p93 = scmp.eq.s32.totalorder %s92, 0
      %s95 = sadd.s32 %s94, 1
      %s96 = scalar_select %p93, %s94, %s95
      %p99 = pneg %p93
      %p100 = scmp.eq.s32.totalorder %s16, 1
      %p101 = por %p99, %p100
      %p102 = scmp.ne.s32.totalorder %s94, %s97
      %p103 = scmp.eq.s32.totalorder %s16, 0
      %p104 = por %p102, %p103
      %p105 = scmp.ne.s32.totalorder %s94, %s97
      %p106 = scmp.eq.s32.totalorder %s21, 1
      %p107 = por %p105, %p106
      %p108 = scmp.ne.s32.totalorder %s97, %s98
      %p109 = scmp.eq.s32.totalorder %s21, 0
      %p110 = por %p108, %p109
      %p111 = scmp.ne.s32.totalorder %s97, %s98
      %p112 = scmp.eq.s32.totalorder %s22, 1
      %p113 = por %p111, %p112
      %p115 = scmp.ne.s32.totalorder %s98, %s114
      %p116 = scmp.eq.s32.totalorder %s22, 0
      %p117 = por %p115, %p116
      %p118 = scmp.le.s32.totalorder 1, %s16
      %p119 = scmp.lt.s32.totalorder %s16, 3
      %p120 = pnand %p118, %p119
      %p121 = pneg %p120
      // Predicated region
      $region9: #{tpu_custom_call.1} parent=5 // pred_check
        _
      $region10: #{tpu_custom_call.1} parent=5 // pred_check_branch
        %123 = sbr.rel (%p120) target = $region12
      $region11: #{tpu_custom_call.1} parent=5 // pred_region
        %s124 = ssub.s32 %s16, 1
        // Predicated region
        $region13: #{tpu_custom_call.1} parent=11 // pred_check
          %p125 = pneg %p63
        $region14: #{tpu_custom_call.1} parent=11 // pred_check_branch
          %127 = sbr.rel (%p125) target = $region16
        $region15: #{tpu_custom_call.1} parent=11 // pred_region
          %s129 = ssub.s32 6272, 6272
          %130 = vsyncadd [#allocation6], %s129
          %s131 = sshll.u32 [#allocation5], 4
          %s132 = int_to_ptr.vmem [resolvable:$true] %s131
          %137 = dma.hbm_to_vmem [thread:$0]  %s1, 6272, %s132, [#allocation6], 64, 64, 4
        $region16: #{tpu_custom_call.1} parent=11 // pred_fallthru
          _
        // Predicated region
        $region17: #{tpu_custom_call.1} parent=11 // pred_check
          %p138 = pneg %p84
        $region18: #{tpu_custom_call.1} parent=11 // pred_check_branch
          %140 = sbr.rel (%p138) target = $region20
        $region19: #{tpu_custom_call.1} parent=11 // pred_region
          _
        $region20: #{tpu_custom_call.1} parent=11 // pred_fallthru
          _
      $region12: #{tpu_custom_call.1} parent=5 // pred_fallthru
        _
      %p141 = scmp.lt.s32.totalorder %s16, 2
      // Predicated region
      $region21: #{tpu_custom_call.1} parent=5 // pred_check
        %p142 = pneg %p141
      $region22: #{tpu_custom_call.1} parent=5 // pred_check_branch
        %144 = sbr.rel (%p142) target = $region24
      $region23: #{tpu_custom_call.1} parent=5 // pred_region
        // Predicated region
        $region25: #{tpu_custom_call.1} parent=23 // pred_check
          %p145 = pneg %p36
        $region26: #{tpu_custom_call.1} parent=23 // pred_check_branch
          %147 = sbr.rel (%p145) target = $region28
        $region27: #{tpu_custom_call.1} parent=23 // pred_region
          %s148 = sand.u32 %s26, 1
          %s149 = scalar_lea.sflag [#allocation3], %s148
          %s150 = sand.u32 %s26, 1
          %s151 = smul.addr %s150, 224
          %s152 = scalar_lea.vmem [#allocation2], %s151
          %s153 = smul.u32 4, %s16
          %s155 = ssub.s32 3584, 3584
          %156 = vsyncadd %s149, %s155
          %s157 = smul.addr %s153, 7
          %s158 = smul.addr %s157, 128
          %s159 = scalar_lea.hbm %s0, %s158
          %s160 = sshll.u32 %s152, 4
          %s161 = int_to_ptr.vmem [resolvable:$true] %s160
          %166 = dma.hbm_to_vmem [thread:$0]  %s159, 3584, %s161, %s149, 896, 896, 56
        $region28: #{tpu_custom_call.1} parent=23 // pred_fallthru
          _
      $region24: #{tpu_custom_call.1} parent=5 // pred_fallthru
        _
      %p167 = scmp.le.s32.totalorder 1, %s16
      %p168 = scmp.lt.s32.totalorder %s16, 3
      %p169 = pnand %p167, %p168
      %p170 = pneg %p169
      // Predicated region
      $region29: #{tpu_custom_call.1} parent=5 // pred_check
        _
      $region30: #{tpu_custom_call.1} parent=5 // pred_check_branch
        %172 = sbr.rel (%p169) target = $region32
      $region31: #{tpu_custom_call.1} parent=5 // pred_region
        %s173 = ssub.s32 %s16, 1
        %s174 = sand.u32 %s29, 1
        %s175 = scalar_lea.sflag [#allocation3], %s174
        %s176 = sand.u32 %s29, 1
        %s177 = smul.addr %s176, 224
        %s178 = scalar_lea.vmem [#allocation2], %s177
        // Predicated region
        $region33: #{tpu_custom_call.1} parent=31 // pred_check
          %p179 = pneg %p42
        $region34: #{tpu_custom_call.1} parent=31 // pred_check_branch
          %181 = sbr.rel (%p179) target = $region36
        $region35: #{tpu_custom_call.1} parent=31 // pred_region
          %182 = dma.done %s175, 3584
        $region36: #{tpu_custom_call.1} parent=31 // pred_fallthru
          _
        // Predicated region
        $region37: #{tpu_custom_call.1} parent=31 // pred_check
          %p183 = pneg %p63
        $region38: #{tpu_custom_call.1} parent=31 // pred_check_branch
          %185 = sbr.rel (%p183) target = $region40
        $region39: #{tpu_custom_call.1} parent=31 // pred_region
          %186 = dma.done [#allocation6], 6272
        $region40: #{tpu_custom_call.1} parent=31 // pred_fallthru
          _
        %s187 = sand.u32 %s29, 1
        %s188 = scalar_lea.sflag [#allocation3], %s187
        %s189 = sand.u32 %s29, 1
        %s190 = smul.addr %s189, 224
        %s191 = scalar_lea.vmem [#allocation2], %s190
        %p192 = pneg %p42
        %p193 = pneg %p39
        %p194 = pneg %p63
        %p195 = pneg %p60
        %p196 = pneg %p84
        %p197 = pneg %p81
        %p198 = pneg %p110
        %p199 = pneg %p107
        %s200 = sand.u32 %s97, 1
        %s201 = scalar_lea.sflag [#allocation4], %s200
        %s202 = sand.u32 %s97, 1
        %s203 = smul.addr %s202, 16
        %s204 = scalar_lea.vmem [#allocation7], %s203
        %s205 = smul.u32 4, %s21
        %s206 = smul.u32 4, %s21
        %v208 = vld [vmem:[%s178] sm:$0xff]
        %v209 = vld [vmem:[%s178 + $0x8] sm:$0xff]
        %v210 = vld [vmem:[%s178 + $0x10] sm:$0xff]
        %v211 = vld [vmem:[%s178 + $0x18] sm:$0xff]
        %v212 = vld [vmem:[%s178 + $0x20] sm:$0xff]
        %v213 = vld [vmem:[%s178 + $0x28] sm:$0xff]
        %v214 = vld [vmem:[%s178 + $0x30] sm:$0xff]
        %v215 = vld [vmem:[%s178 + $0x38] sm:$0xff]
        %v216 = vld [vmem:[%s178 + $0x40] sm:$0xff]
        %v217 = vld [vmem:[%s178 + $0x48] sm:$0xff]
        %v218 = vld [vmem:[%s178 + $0x50] sm:$0xff]
        %v219 = vld [vmem:[%s178 + $0x58] sm:$0xff]
        %v220 = vld [vmem:[%s178 + $0x60] sm:$0xff]
        %v221 = vld [vmem:[%s178 + $0x68] sm:$0xff]
        %v222 = vld [vmem:[%s178 + $0x70] sm:$0xff]
        %v223 = vld [vmem:[%s178 + $0x78] sm:$0xff]
        %v224 = vld [vmem:[%s178 + $0x80] sm:$0xff]
        %v225 = vld [vmem:[%s178 + $0x88] sm:$0xff]
        %v226 = vld [vmem:[%s178 + $0x90] sm:$0xff]
        %v227 = vld [vmem:[%s178 + $0x98] sm:$0xff]
        %v228 = vld [vmem:[%s178 + $0xa0] sm:$0xff]
        %v229 = vld [vmem:[%s178 + $0xa8] sm:$0xff]
        %v230 = vld [vmem:[%s178 + $0xb0] sm:$0xff]
        %v231 = vld [vmem:[%s178 + $0xb8] sm:$0xff]
        %v232 = vld [vmem:[%s178 + $0xc0] sm:$0xff]
        %v233 = vld [vmem:[%s178 + $0xc8] sm:$0xff]
        %v234 = vld [vmem:[%s178 + $0xd0] sm:$0xff]
        %v235 = vld [vmem:[%s178 + $0xd8] sm:$0xff]
        %v236 = vpack.c.bf16 %v215, %v208
        %v237 = vpack.c.bf16 %v216, %v209
        %v238 = vpack.c.bf16 %v217, %v210
        %v239 = vpack.c.bf16 %v218, %v211
        %v240 = vpack.c.bf16 %v219, %v212
        %v241 = vpack.c.bf16 %v220, %v213
        %v242 = vpack.c.bf16 %v221, %v214
        %v243 = vpack.c.bf16 %v229, %v222
        %v244 = vpack.c.bf16 %v230, %v223
        %v245 = vpack.c.bf16 %v231, %v224
        %v246 = vpack.c.bf16 %v232, %v225
        %v247 = vpack.c.bf16 %v233, %v226
        %v248 = vpack.c.bf16 %v234, %v227
        %v249 = vpack.c.bf16 %v235, %v228
        %v250 = vld [vmem:[#allocation5] sm:$0xf]
        %v251 = vld [vmem:[#allocation5 + $0x4] sm:$0xf]
        %v252 = vld [vmem:[#allocation5 + $0x8] sm:$0xf]
        %v253 = vld [vmem:[#allocation5 + $0xc] sm:$0xf]
        %v254 = vld [vmem:[#allocation5 + $0x10] sm:$0xf]
        %v255 = vld [vmem:[#allocation5 + $0x14] sm:$0xf]
        %v256 = vld [vmem:[#allocation5 + $0x18] sm:$0xf]
        %v257 = vld [vmem:[#allocation5 + $0x1c] sm:$0xf]
        %v258 = vld [vmem:[#allocation5 + $0x20] sm:$0xf]
        %v259 = vld [vmem:[#allocation5 + $0x24] sm:$0xf]
        %v260 = vld [vmem:[#allocation5 + $0x28] sm:$0xf]
        %v261 = vld [vmem:[#allocation5 + $0x2c] sm:$0xf]
        %v262 = vld [vmem:[#allocation5 + $0x30] sm:$0xf]
        %v263 = vld [vmem:[#allocation5 + $0x34] sm:$0xf]
        %v264 = vld [vmem:[#allocation5 + $0x38] sm:$0xf]
        %v265 = vld [vmem:[#allocation5 + $0x3c] sm:$0xf]
        %v266 = vld [vmem:[#allocation5 + $0x40] sm:$0xf]
        %v267 = vld [vmem:[#allocation5 + $0x44] sm:$0xf]
        %v268 = vld [vmem:[#allocation5 + $0x48] sm:$0xf]
        %v269 = vld [vmem:[#allocation5 + $0x4c] sm:$0xf]
        %v270 = vld [vmem:[#allocation5 + $0x50] sm:$0xf]
        %v271 = vld [vmem:[#allocation5 + $0x54] sm:$0xf]
        %v272 = vld [vmem:[#allocation5 + $0x58] sm:$0xf]
        %v273 = vld [vmem:[#allocation5 + $0x5c] sm:$0xf]
        %v274 = vld [vmem:[#allocation5 + $0x60] sm:$0xf]
        %v275 = vld [vmem:[#allocation5 + $0x64] sm:$0xf]
        %v276 = vld [vmem:[#allocation5 + $0x68] sm:$0xf]
        %v277 = vld [vmem:[#allocation5 + $0x6c] sm:$0xf]
        %v278 = vld [vmem:[#allocation5 + $0x70] sm:$0xf]
        %v279 = vld [vmem:[#allocation5 + $0x74] sm:$0xf]
        %v280 = vld [vmem:[#allocation5 + $0x78] sm:$0xf]
        %v281 = vld [vmem:[#allocation5 + $0x7c] sm:$0xf]
        %v282 = vld [vmem:[#allocation5 + $0x80] sm:$0xf]
        %v283 = vld [vmem:[#allocation5 + $0x84] sm:$0xf]
        %v284 = vld [vmem:[#allocation5 + $0x88] sm:$0xf]
        %v285 = vld [vmem:[#allocation5 + $0x8c] sm:$0xf]
        %v286 = vld [vmem:[#allocation5 + $0x90] sm:$0xf]
        %v287 = vld [vmem:[#allocation5 + $0x94] sm:$0xf]
        %v288 = vld [vmem:[#allocation5 + $0x98] sm:$0xf]
        %v289 = vld [vmem:[#allocation5 + $0x9c] sm:$0xf]
        %v290 = vld [vmem:[#allocation5 + $0xa0] sm:$0xf]
        %v291 = vld [vmem:[#allocation5 + $0xa4] sm:$0xf]
        %v292 = vld [vmem:[#allocation5 + $0xa8] sm:$0xf]
        %v293 = vld [vmem:[#allocation5 + $0xac] sm:$0xf]
        %v294 = vld [vmem:[#allocation5 + $0xb0] sm:$0xf]
        %v295 = vld [vmem:[#allocation5 + $0xb4] sm:$0xf]
        %v296 = vld [vmem:[#allocation5 + $0xb8] sm:$0xf]
        %v297 = vld [vmem:[#allocation5 + $0xbc] sm:$0xf]
        %v298 = vld [vmem:[#allocation5 + $0xc0] sm:$0xf]
        %v299 = vld [vmem:[#allocation5 + $0xc4] sm:$0xf]
        %v300 = vld [vmem:[#allocation5 + $0xc8] sm:$0xf]
        %v301 = vld [vmem:[#allocation5 + $0xcc] sm:$0xf]
        %v302 = vld [vmem:[#allocation5 + $0xd0] sm:$0xf]
        %v303 = vld [vmem:[#allocation5 + $0xd4] sm:$0xf]
        %v304 = vld [vmem:[#allocation5 + $0xd8] sm:$0xf]
        %v305 = vld [vmem:[#allocation5 + $0xdc] sm:$0xf]
        %v306 = vld [vmem:[#allocation5 + $0xe0] sm:$0xf]
        %v307 = vld [vmem:[#allocation5 + $0xe4] sm:$0xf]
        %v308 = vld [vmem:[#allocation5 + $0xe8] sm:$0xf]
        %v309 = vld [vmem:[#allocation5 + $0xec] sm:$0xf]
        %v310 = vld [vmem:[#allocation5 + $0xf0] sm:$0xf]
        %v311 = vld [vmem:[#allocation5 + $0xf4] sm:$0xf]
        %v312 = vld [vmem:[#allocation5 + $0xf8] sm:$0xf]
        %v313 = vld [vmem:[#allocation5 + $0xfc] sm:$0xf]
        %v314 = vld [vmem:[#allocation5 + $0x100] sm:$0xf]
        %v315 = vld [vmem:[#allocation5 + $0x104] sm:$0xf]
        %v316 = vld [vmem:[#allocation5 + $0x108] sm:$0xf]
        %v317 = vld [vmem:[#allocation5 + $0x10c] sm:$0xf]
        %v318 = vld [vmem:[#allocation5 + $0x110] sm:$0xf]
        %v319 = vld [vmem:[#allocation5 + $0x114] sm:$0xf]
        %v320 = vld [vmem:[#allocation5 + $0x118] sm:$0xf]
        %v321 = vld [vmem:[#allocation5 + $0x11c] sm:$0xf]
        %v322 = vld [vmem:[#allocation5 + $0x120] sm:$0xf]
        %v323 = vld [vmem:[#allocation5 + $0x124] sm:$0xf]
        %v324 = vld [vmem:[#allocation5 + $0x128] sm:$0xf]
        %v325 = vld [vmem:[#allocation5 + $0x12c] sm:$0xf]
        %v326 = vld [vmem:[#allocation5 + $0x130] sm:$0xf]
        %v327 = vld [vmem:[#allocation5 + $0x134] sm:$0xf]
        %v328 = vld [vmem:[#allocation5 + $0x138] sm:$0xf]
        %v329 = vld [vmem:[#allocation5 + $0x13c] sm:$0xf]
        %v330 = vld [vmem:[#allocation5 + $0x140] sm:$0xf]
        %v331 = vld [vmem:[#allocation5 + $0x144] sm:$0xf]
        %v332 = vld [vmem:[#allocation5 + $0x148] sm:$0xf]
        %v333 = vld [vmem:[#allocation5 + $0x14c] sm:$0xf]
        %v334 = vld [vmem:[#allocation5 + $0x150] sm:$0xf]
        %v335 = vld [vmem:[#allocation5 + $0x154] sm:$0xf]
        %v336 = vld [vmem:[#allocation5 + $0x158] sm:$0xf]
        %v337 = vld [vmem:[#allocation5 + $0x15c] sm:$0xf]
        %v338 = vld [vmem:[#allocation5 + $0x160] sm:$0xf]
        %v339 = vld [vmem:[#allocation5 + $0x164] sm:$0xf]
        %v340 = vld [vmem:[#allocation5 + $0x168] sm:$0xf]
        %v341 = vld [vmem:[#allocation5 + $0x16c] sm:$0xf]
        %v342 = vld [vmem:[#allocation5 + $0x170] sm:$0xf]
        %v343 = vld [vmem:[#allocation5 + $0x174] sm:$0xf]
        %v344 = vld [vmem:[#allocation5 + $0x178] sm:$0xf]
        %v345 = vld [vmem:[#allocation5 + $0x17c] sm:$0xf]
        %v346 = vld [vmem:[#allocation5 + $0x180] sm:$0xf]
        %v347 = vld [vmem:[#allocation5 + $0x184] sm:$0xf]
        %v348 = vld [vmem:[%s2] sm:$0x1]
        %v350 = vlaneseq
        %v351 = vshrl.u32 %v350, 7
        %v352 = vsub.s32 0, %v351
        %v353 = vrot.slane %v348, %v352
        %v453 = vunpack.c.l.b16 %v250
        %v454 = vunpack.c.l.b16 %v251
        %v455 = vunpack.c.l.b16 %v252
        %v456 = vunpack.c.l.b16 %v253
        %v457 = vunpack.c.l.b16 %v254
        %v458 = vunpack.c.l.b16 %v255
        %v459 = vunpack.c.l.b16 %v256
        %v460 = vunpack.c.l.b16 %v257
        %v461 = vunpack.c.l.b16 %v258
        %v462 = vunpack.c.l.b16 %v259
        %v463 = vunpack.c.l.b16 %v260
        %v464 = vunpack.c.l.b16 %v261
        %v465 = vunpack.c.l.b16 %v262
        %v466 = vunpack.c.l.b16 %v263
        %v467 = vunpack.c.l.b16 %v264
        %v468 = vunpack.c.l.b16 %v265
        %v469 = vunpack.c.l.b16 %v266
        %v470 = vunpack.c.l.b16 %v267
        %v471 = vunpack.c.l.b16 %v268
        %v472 = vunpack.c.l.b16 %v269
        %v473 = vunpack.c.l.b16 %v270
        %v474 = vunpack.c.l.b16 %v271
        %v475 = vunpack.c.l.b16 %v272
        %v476 = vunpack.c.l.b16 %v273
        %v477 = vunpack.c.l.b16 %v274
        %v478 = vunpack.c.l.b16 %v275
        %v479 = vunpack.c.l.b16 %v276
        %v480 = vunpack.c.l.b16 %v277
        %v481 = vunpack.c.l.b16 %v278
        %v482 = vunpack.c.l.b16 %v279
        %v483 = vunpack.c.l.b16 %v280
        %v484 = vunpack.c.l.b16 %v281
        %v485 = vunpack.c.l.b16 %v282
        %v486 = vunpack.c.l.b16 %v283
        %v487 = vunpack.c.l.b16 %v284
        %v488 = vunpack.c.l.b16 %v285
        %v489 = vunpack.c.l.b16 %v286
        %v490 = vunpack.c.l.b16 %v287
        %v491 = vunpack.c.l.b16 %v288
        %v492 = vunpack.c.l.b16 %v289
        %v493 = vunpack.c.l.b16 %v290
        %v494 = vunpack.c.l.b16 %v291
        %v495 = vunpack.c.l.b16 %v292
        %v496 = vunpack.c.l.b16 %v293
        %v497 = vunpack.c.l.b16 %v294
        %v498 = vunpack.c.l.b16 %v295
        %v499 = vunpack.c.l.b16 %v296
        %v500 = vunpack.c.l.b16 %v297
        %v501 = vunpack.c.l.b16 %v298
        %v502 = vunpack.c.l.b16 %v299
        %v503 = vunpack.c.l.b16 %v300
        %v504 = vunpack.c.l.b16 %v301
        %v505 = vunpack.c.l.b16 %v302
        %v506 = vunpack.c.l.b16 %v303
        %v507 = vunpack.c.l.b16 %v304
        %v508 = vunpack.c.l.b16 %v305
        %v509 = vunpack.c.l.b16 %v306
        %v510 = vunpack.c.l.b16 %v307
        %v511 = vunpack.c.l.b16 %v308
        %v512 = vunpack.c.l.b16 %v309
        %v513 = vunpack.c.l.b16 %v310
        %v514 = vunpack.c.l.b16 %v311
        %v515 = vunpack.c.l.b16 %v312
        %v516 = vunpack.c.l.b16 %v313
        %v517 = vunpack.c.l.b16 %v314
        %v518 = vunpack.c.l.b16 %v315
        %v519 = vunpack.c.l.b16 %v316
        %v520 = vunpack.c.l.b16 %v317
        %v521 = vunpack.c.l.b16 %v318
        %v522 = vunpack.c.l.b16 %v319
        %v523 = vunpack.c.l.b16 %v320
        %v524 = vunpack.c.l.b16 %v321
        %v525 = vunpack.c.l.b16 %v322
        %v526 = vunpack.c.l.b16 %v323
        %v527 = vunpack.c.l.b16 %v324
        %v528 = vunpack.c.l.b16 %v325
        %v529 = vunpack.c.l.b16 %v326
        %v530 = vunpack.c.l.b16 %v327
        %v531 = vunpack.c.l.b16 %v328
        %v532 = vunpack.c.l.b16 %v329
        %v533 = vunpack.c.l.b16 %v330
        %v534 = vunpack.c.l.b16 %v331
        %v535 = vunpack.c.l.b16 %v332
        %v536 = vunpack.c.l.b16 %v333
        %v537 = vunpack.c.l.b16 %v334
        %v538 = vunpack.c.l.b16 %v335
        %v539 = vunpack.c.l.b16 %v336
        %v540 = vunpack.c.l.b16 %v337
        %v541 = vunpack.c.l.b16 %v338
        %v542 = vunpack.c.l.b16 %v339
        %v543 = vunpack.c.l.b16 %v340
        %v544 = vunpack.c.l.b16 %v341
        %v545 = vunpack.c.l.b16 %v342
        %v546 = vunpack.c.l.b16 %v343
        %v547 = vunpack.c.l.b16 %v344
        %v548 = vunpack.c.l.b16 %v345
        %v549 = vunpack.c.l.b16 %v346
        %v550 = vunpack.c.l.b16 %v347
        %v551 = vpack.c.b16 %v454, %v453
        %v552 = vpack.c.b16 %v456, %v455
        %v553 = vpack.c.b16 %v458, %v457
        %v554 = vpack.c.b16 %v460, %v459
        %v555 = vpack.c.b16 %v462, %v461
        %v556 = vpack.c.b16 %v464, %v463
        %v557 = vpack.c.b16 %v466, %v465
        %v558 = vpack.c.b16 %v468, %v467
        %v559 = vpack.c.b16 %v470, %v469
        %v560 = vpack.c.b16 %v472, %v471
        %v561 = vpack.c.b16 %v474, %v473
        %v562 = vpack.c.b16 %v476, %v475
        %v563 = vpack.c.b16 %v478, %v477
        %v564 = vpack.c.b16 %v480, %v479
        %v565 = vpack.c.b16 %v482, %v481
        %v566 = vpack.c.b16 %v484, %v483
        %v567 = vpack.c.b16 %v486, %v485
        %v568 = vpack.c.b16 %v488, %v487
        %v569 = vpack.c.b16 %v490, %v489
        %v570 = vpack.c.b16 %v492, %v491
        %v571 = vpack.c.b16 %v494, %v493
        %v572 = vpack.c.b16 %v496, %v495
        %v573 = vpack.c.b16 %v498, %v497
        %v574 = vpack.c.b16 %v500, %v499
        %v575 = vpack.c.b16 %v502, %v501
        %v576 = vpack.c.b16 %v504, %v503
        %v577 = vpack.c.b16 %v506, %v505
        %v578 = vpack.c.b16 %v508, %v507
        %v579 = vpack.c.b16 %v510, %v509
        %v580 = vpack.c.b16 %v512, %v511
        %v581 = vpack.c.b16 %v514, %v513
        %v582 = vpack.c.b16 %v516, %v515
        %v583 = vpack.c.b16 %v518, %v517
        %v584 = vpack.c.b16 %v520, %v519
        %v585 = vpack.c.b16 %v522, %v521
        %v586 = vpack.c.b16 %v524, %v523
        %v587 = vpack.c.b16 %v526, %v525
        %v588 = vpack.c.b16 %v528, %v527
        %v589 = vpack.c.b16 %v530, %v529
        %v590 = vpack.c.b16 %v532, %v531
        %v591 = vpack.c.b16 %v534, %v533
        %v592 = vpack.c.b16 %v536, %v535
        %v593 = vpack.c.b16 %v538, %v537
        %v594 = vpack.c.b16 %v540, %v539
        %v595 = vpack.c.b16 %v542, %v541
        %v596 = vpack.c.b16 %v544, %v543
        %v597 = vpack.c.b16 %v546, %v545
        %v598 = vpack.c.b16 %v548, %v547
        %v599 = vpack.c.b16 %v550, %v549
        %vm649 = vcmask 130048
        %v651 = vsel %vm649, %v242, 0
        %v654 = vsel %vm649, %v249, 0
        %656 = vmatprep.subr.bf16.mxu0 0
        %657 = vmatpush1.bf16.msra.mxu0 %v551
        %658 = vmatprep.subr.bf16.mxu0 0
        %659 = vmatpush1.bf16.msra.mxu0 %v552
        %660 = vmatprep.subr.bf16.mxu0 0
        %661 = vmatpush1.bf16.msra.mxu0 %v553
        %662 = vmatprep.subr.bf16.mxu0 0
        %663 = vmatpush1.bf16.msra.mxu0 %v554
        %664 = vmatprep.subr.bf16.mxu0 0
        %665 = vmatpush1.bf16.msra.mxu0 %v555
        %666 = vmatprep.subr.bf16.mxu0 0
        %667 = vmatpush1.bf16.msra.mxu0 %v556
        %668 = vmatprep.subr.bf16.mxu0 0
        %669 = vmatpush1.bf16.msra.mxu0 %v557
        %670 = vmatprep.subr.bf16.mxu0 0
        %671 = vmatpush1.bf16.msra.mxu0 %v558
        %672 = vmatprep.subr.bf16.mxu0 0
        %673 = vmatpush1.bf16.msra.mxu0 %v559
        %674 = vmatprep.subr.bf16.mxu0 0
        %675 = vmatpush1.bf16.msra.mxu0 %v560
        %676 = vmatprep.subr.bf16.mxu0 0
        %677 = vmatpush1.bf16.msra.mxu0 %v561
        %678 = vmatprep.subr.bf16.mxu0 0
        %679 = vmatpush1.bf16.msra.mxu0 %v562
        %680 = vmatprep.subr.bf16.mxu0 0
        %681 = vmatpush1.bf16.msra.mxu0 %v563
        %682 = vmatprep.subr.bf16.mxu0 0
        %683 = vmatpush1.bf16.msra.mxu0 %v564
        %684 = vmatprep.subr.bf16.mxu0 0
        %685 = vmatpush1.bf16.msra.mxu0 %v565
        %686 = vmatprep.subr.bf16.mxu0 0
        %687 = vmatpush1.bf16.msra.mxu0 %v566
        %688 = vmatprep.mubr.bf16.mxu0 %v237
        %689 = vmatmul.mubr.bf16.gmra.mrb[0].mxu0 %v236
        %v690 = vpop.f32.mrb[0].mxu0
        %v691 = vadd.f32 %v353, %v690
        %v692 = vpop.f32.mrb[0].mxu0
        %v693 = vpop.f32.mrb[0].mxu0
        %v694 = vadd.f32 %v353, %v693
        %v695 = vpop.f32.mrb[0].mxu0
        %696 = vmatprep.mubr.bf16.mxu0 %v244
        %697 = vmatmul.mubr.bf16.gmra.mrb[0].mxu0 %v243
        %v698 = vpop.f32.mrb[0].mxu0
        %v699 = vadd.f32 %v353, %v698
        %v700 = vpop.f32.mrb[0].mxu0
        %v701 = vpop.f32.mrb[0].mxu0
        %v702 = vadd.f32 %v353, %v701
        %v703 = vpop.f32.mrb[0].mxu0
        %704 = vdwg.mxu0
        %705 = vmatprep.subr.bf16.mxu0 0
        %706 = vmatpush1.bf16.msra.mxu0 %v567
        %707 = vmatprep.subr.bf16.mxu0 0
        %708 = vmatpush1.bf16.msra.mxu0 %v568
        %709 = vmatprep.subr.bf16.mxu0 0
        %710 = vmatpush1.bf16.msra.mxu0 %v569
        %711 = vmatprep.subr.bf16.mxu0 0
        %712 = vmatpush1.bf16.msra.mxu0 %v570
        %713 = vmatprep.subr.bf16.mxu0 0
        %714 = vmatpush1.bf16.msra.mxu0 %v571
        %715 = vmatprep.subr.bf16.mxu0 0
        %716 = vmatpush1.bf16.msra.mxu0 %v572
        %717 = vmatprep.subr.bf16.mxu0 0
        %718 = vmatpush1.bf16.msra.mxu0 %v573
        %719 = vmatprep.subr.bf16.mxu0 0
        %720 = vmatpush1.bf16.msra.mxu0 %v574
        %721 = vmatprep.subr.bf16.mxu0 0
        %722 = vmatpush1.bf16.msra.mxu0 %v575
        %723 = vmatprep.subr.bf16.mxu0 0
        %724 = vmatpush1.bf16.msra.mxu0 %v576
        %725 = vmatprep.subr.bf16.mxu0 0
        %726 = vmatpush1.bf16.msra.mxu0 %v577
        %727 = vmatprep.subr.bf16.mxu0 0
        %728 = vmatpush1.bf16.msra.mxu0 %v578
        %729 = vmatprep.subr.bf16.mxu0 0
        %730 = vmatpush1.bf16.msra.mxu0 %v579
        %731 = vmatprep.subr.bf16.mxu0 0
        %732 = vmatpush1.bf16.msra.mxu0 %v580
        %733 = vmatprep.subr.bf16.mxu0 0
        %734 = vmatpush1.bf16.msra.mxu0 %v581
        %735 = vmatprep.subr.bf16.mxu0 0
        %736 = vmatpush1.bf16.msra.mxu0 %v582
        %737 = vmatprep.mubr.bf16.mxu0 %v239
        %738 = vmatmul.mubr.bf16.gmra.mrb[0].mxu0 %v238
        %v739 = vpop.f32.mrb[0].mxu0
        %v740 = vadd.f32 %v691, %v739
        %v741 = vpop.f32.mrb[0].mxu0
        %v742 = vpop.f32.mrb[0].mxu0
        %v743 = vadd.f32 %v694, %v742
        %v744 = vpop.f32.mrb[0].mxu0
        %745 = vmatprep.mubr.bf16.mxu0 %v246
        %746 = vmatmul.mubr.bf16.gmra.mrb[0].mxu0 %v245
        %v747 = vpop.f32.mrb[0].mxu0
        %v748 = vadd.f32 %v699, %v747
        %v749 = vpop.f32.mrb[0].mxu0
        %v750 = vpop.f32.mrb[0].mxu0
        %v751 = vadd.f32 %v702, %v750
        %v752 = vpop.f32.mrb[0].mxu0
        %753 = vdwg.mxu0
        %754 = vmatprep.subr.bf16.mxu0 0
        %755 = vmatpush1.bf16.msra.mxu0 %v583
        %756 = vmatprep.subr.bf16.mxu0 0
        %757 = vmatpush1.bf16.msra.mxu0 %v584
        %758 = vmatprep.subr.bf16.mxu0 0
        %759 = vmatpush1.bf16.msra.mxu0 %v585
        %760 = vmatprep.subr.bf16.mxu0 0
        %761 = vmatpush1.bf16.msra.mxu0 %v586
        %762 = vmatprep.subr.bf16.mxu0 0
        %763 = vmatpush1.bf16.msra.mxu0 %v587
        %764 = vmatprep.subr.bf16.mxu0 0
        %765 = vmatpush1.bf16.msra.mxu0 %v588
        %766 = vmatprep.subr.bf16.mxu0 0
        %767 = vmatpush1.bf16.msra.mxu0 %v589
        %768 = vmatprep.subr.bf16.mxu0 0
        %769 = vmatpush1.bf16.msra.mxu0 %v590
        %770 = vmatprep.subr.bf16.mxu0 0
        %771 = vmatpush1.bf16.msra.mxu0 %v591
        %772 = vmatprep.subr.bf16.mxu0 0
        %773 = vmatpush1.bf16.msra.mxu0 %v592
        %774 = vmatprep.subr.bf16.mxu0 0
        %775 = vmatpush1.bf16.msra.mxu0 %v593
        %776 = vmatprep.subr.bf16.mxu0 0
        %777 = vmatpush1.bf16.msra.mxu0 %v594
        %778 = vmatprep.subr.bf16.mxu0 0
        %779 = vmatpush1.bf16.msra.mxu0 %v595
        %780 = vmatprep.subr.bf16.mxu0 0
        %781 = vmatpush1.bf16.msra.mxu0 %v596
        %782 = vmatprep.subr.bf16.mxu0 0
        %783 = vmatpush1.bf16.msra.mxu0 %v597
        %784 = vmatprep.subr.bf16.mxu0 0
        %785 = vmatpush1.bf16.msra.mxu0 %v598
        %786 = vmatprep.mubr.bf16.mxu0 %v241
        %787 = vmatmul.mubr.bf16.gmra.mrb[0].mxu0 %v240
        %v788 = vpop.f32.mrb[0].mxu0
        %v789 = vadd.f32 %v740, %v788
        %v790 = vpop.f32.mrb[0].mxu0
        %v791 = vpop.f32.mrb[0].mxu0
        %v792 = vadd.f32 %v743, %v791
        %v793 = vpop.f32.mrb[0].mxu0
        %794 = vmatprep.mubr.bf16.mxu0 %v248
        %795 = vmatmul.mubr.bf16.gmra.mrb[0].mxu0 %v247
        %v796 = vpop.f32.mrb[0].mxu0
        %v797 = vadd.f32 %v748, %v796
        %v798 = vpop.f32.mrb[0].mxu0
        %v799 = vpop.f32.mrb[0].mxu0
        %v800 = vadd.f32 %v751, %v799
        %v801 = vpop.f32.mrb[0].mxu0
        %802 = vdwg.mxu0
        %803 = vmatprep.subr.bf16.mxu0 0
        %804 = vmatpush1.bf16.msra.mxu0 %v599
        %805 = vmatprep.subr.bf16.mxu0 0
        %806 = vmatpush1.bf16.msra.mxu0 0
        %807 = vmatprep.subr.bf16.mxu0 0
        %808 = vmatpush1.bf16.msra.mxu0 0
        %809 = vmatprep.subr.bf16.mxu0 0
        %810 = vmatpush1.bf16.msra.mxu0 0
        %811 = vmatprep.subr.bf16.mxu0 0
        %812 = vmatpush1.bf16.msra.mxu0 0
        %813 = vmatprep.subr.bf16.mxu0 0
        %814 = vmatpush1.bf16.msra.mxu0 0
        %815 = vmatprep.subr.bf16.mxu0 0
        %816 = vmatpush1.bf16.msra.mxu0 0
        %817 = vmatprep.subr.bf16.mxu0 0
        %818 = vmatpush1.bf16.msra.mxu0 0
        %819 = vmatprep.subr.bf16.mxu0 0
        %820 = vmatpush1.bf16.msra.mxu0 0
        %821 = vmatprep.subr.bf16.mxu0 0
        %822 = vmatpush1.bf16.msra.mxu0 0
        %823 = vmatprep.subr.bf16.mxu0 0
        %824 = vmatpush1.bf16.msra.mxu0 0
        %825 = vmatprep.subr.bf16.mxu0 0
        %826 = vmatpush1.bf16.msra.mxu0 0
        %827 = vmatprep.subr.bf16.mxu0 0
        %828 = vmatpush1.bf16.msra.mxu0 0
        %829 = vmatprep.subr.bf16.mxu0 0
        %830 = vmatpush1.bf16.msra.mxu0 0
        %831 = vmatprep.subr.bf16.mxu0 0
        %832 = vmatpush1.bf16.msra.mxu0 0
        %833 = vmatprep.subr.bf16.mxu0 0
        %834 = vmatpush1.bf16.msra.mxu0 0
        %835 = vmatprep.mubr.bf16.mxu0 0
        %836 = vmatmul.mubr.bf16.gmra.mrb[0].mxu0 %v651
        %v837 = vpop.f32.mrb[0].mxu0
        %v838 = vadd.f32 %v789, %v837
        %v839 = vpop.f32.mrb[0].mxu0
        %v840 = vpop.f32.mrb[0].mxu0
        %v841 = vadd.f32 %v792, %v840
        %v842 = vpop.f32.mrb[0].mxu0
        %843 = vmatprep.mubr.bf16.mxu0 0
        %844 = vmatmul.mubr.bf16.gmra.mrb[0].mxu0 %v654
        %v845 = vpop.f32.mrb[0].mxu0
        %v846 = vadd.f32 %v797, %v845
        %v847 = vpop.f32.mrb[0].mxu0
        %v848 = vpop.f32.mrb[0].mxu0
        %v849 = vadd.f32 %v800, %v848
        %v850 = vpop.f32.mrb[0].mxu0
        %851 = vdwg.mxu0
        %v852 = vpack.c.bf16 %v841, %v838
        %v853 = vpack.c.bf16 %v849, %v846
        %v856 = vunpack.c.l.b16 %v852
        %v857 = vunpack.c.h.b16 %v852
        %v858 = vunpack.c.l.b16 %v853
        %v859 = vunpack.c.h.b16 %v853
        %v860 = vpack.c.b16 %v856, %v856
        %v861 = vpack.c.b16 %v857, %v857
        %v862 = vpack.c.b16 %v858, %v858
        %v863 = vpack.c.b16 %v859, %v859
        %868 = vst [vmem:[%s204] sm:$0xf] %v860
        %869 = vst [vmem:[%s204 + $0x4] sm:$0xf] %v861
        %870 = vst [vmem:[%s204 + $0x8] sm:$0xf] %v862
        %871 = vst [vmem:[%s204 + $0xc] sm:$0xf] %v863
        %s872 = sand.u32 %s97, 1
        %s873 = scalar_lea.sflag [#allocation4], %s872
        %s874 = sand.u32 %s97, 1
        %s875 = smul.addr %s874, 16
        %s876 = scalar_lea.vmem [#allocation7], %s875
        // Predicated region
        $region41: #{tpu_custom_call.1} parent=31 // pred_check
          %p877 = pneg %p107
        $region42: #{tpu_custom_call.1} parent=31 // pred_check_branch
          %879 = sbr.rel (%p877) target = $region44
        $region43: #{tpu_custom_call.1} parent=31 // pred_region
          %s880 = smul.u32 4, %s21
          %s882 = ssub.s32 256, 256
          %883 = vsyncadd %s873, %s882
          %s884 = smul.addr %s880, 64
          %s885 = scalar_lea.hbm %s3, %s884
          %s886 = sshll.u32 %s876, 4
          %s887 = int_to_ptr.vmem [resolvable:$true] %s886
          %892 = dma.vmem_to_hbm [thread:$0]  %s887, 256, %s885, %s873, 64, 64, 4
        $region44: #{tpu_custom_call.1} parent=31 // pred_fallthru
          _
      $region32: #{tpu_custom_call.1} parent=5 // pred_fallthru
        _
      %p893 = scmp.le.s32.totalorder 2, %s16
      // Predicated region
      $region45: #{tpu_custom_call.1} parent=5 // pred_check
        %p894 = pneg %p893
      $region46: #{tpu_custom_call.1} parent=5 // pred_check_branch
        %896 = sbr.rel (%p894) target = $region48
      $region47: #{tpu_custom_call.1} parent=5 // pred_region
        %s897 = ssub.s32 %s16, 2
        // Predicated region
        $region49: #{tpu_custom_call.1} parent=47 // pred_check
          %p898 = pneg %p113
        $region50: #{tpu_custom_call.1} parent=47 // pred_check_branch
          %900 = sbr.rel (%p898) target = $region52
        $region51: #{tpu_custom_call.1} parent=47 // pred_region
          %s901 = sand.u32 %s98, 1
          %s902 = scalar_lea.sflag [#allocation4], %s901
          %s903 = sand.u32 %s98, 1
          %s904 = smul.addr %s903, 16
          %s905 = scalar_lea.vmem [#allocation7], %s904
          %906 = dma.done %s902, 256
        $region52: #{tpu_custom_call.1} parent=47 // pred_fallthru
          _
      $region48: #{tpu_custom_call.1} parent=5 // pred_fallthru
        _
    $region6: #{tpu_custom_call.1} parent=1 // loop_footer
      %s20 = sadd.s32 1, %s16
    $region7: #{tpu_custom_call.1} parent=1 // loop_footer_branch
      %15 = sbr.rel target = $region3
    $region8: #{tpu_custom_call.1} parent=1 // loop_exit
      _
    %907 = vsyncpa [#allocation3], 1
    %s908 = scalar_lea.sflag [#allocation3], 1
    %909 = vsyncpa %s908, 1
    %910 = vsyncpa [#allocation6], 1
    %911 = vsyncpa [#allocation4], 1
    %s912 = scalar_lea.sflag [#allocation4], 1
    %913 = vsyncpa %s912, 1

</llo_original>
